<compile_context>
chip_gen: v7x
topology: tpu7x:2x2x1
jax: 0.10.0
libtpu: 0.0.40
codegen_flags: <defaults>
</compile_context>

<pallas_src>
import math
from functools import partial

import jax
import jax.numpy as jnp
from jax.experimental import pallas as pl
from jax.experimental.pallas import tpu as pltpu


def _round_up(x, m):
    return ((x + m - 1) // m) * m


def _cdiv(a, b):
    return (a + b - 1) // b


def _vmem_capacity_bytes():
    """Physical VMEM: 128 MiB on v5e/v6e, 64 MiB per TC on v7x; conservative fallback."""
    try:
        return int(pltpu.get_tpu_info().vmem_capacity_bytes)
    except Exception:
        return 64 * 1024 * 1024


def _mdn_epilogue(y, o_ref, *, nd, ndo, n_pi_pad, n_ps_pad, n_pad):
    """Per-column-region activation of the fused slab y (f32) + lane-dense store(s).

    Columns [0, nd)          : softmax over those nd columns (pi)
            [nd, nd+ndo)     : exp                            (sigma)
            [nd+ndo, n_pad)  : identity                       (mu + zero padding)
    """
    # pi max over the first lane-aligned slice containing all nd pi columns.
    y_pi = y[:, :n_pi_pad]
    pi_mask = jax.lax.broadcasted_iota(jnp.int32, y_pi.shape, 1) < nd
    m = jnp.max(jnp.where(pi_mask, y_pi, jnp.finfo(jnp.float32).min),
                axis=1, keepdims=True)

    # Single exp over the pi+sigma lane slice: exp(y - m) on pi lanes, exp(y) elsewhere.
    # Non pi/sigma lanes are discarded by select below (keep select-style masking).
    y_ps = y[:, :n_ps_pad]
    col = jax.lax.broadcasted_iota(jnp.int32, y_ps.shape, 1)
    is_pi = col < nd
    is_sig = jnp.logical_and(col >= nd, col < nd + ndo)
    e = jnp.exp(jnp.where(is_pi, y_ps - m, y_ps))

    denom = jnp.sum(jnp.where(pi_mask, e[:, :n_pi_pad], 0.0), axis=1, keepdims=True)
    r = pl.reciprocal(denom, approx=True)   # EUP vrcp; denom >= 1 (max term contributes exp(0))
    r = r * (2.0 - denom * r)               # one Newton step -> ~f32 accuracy

    out_ps = jnp.where(is_pi, e * r, jnp.where(is_sig, e, y_ps))
    if n_ps_pad == n_pad:
        o_ref[...] = out_ps.astype(o_ref.dtype)
    else:
        # Both slices are 128-lane aligned -> unmasked full-width stores.
        o_ref[:, :n_ps_pad] = out_ps.astype(o_ref.dtype)
        o_ref[:, n_ps_pad:] = y[:, n_ps_pad:].astype(o_ref.dtype)


def _mdn_kernel(x_ref, w_ref, b_ref, o_ref, *, nd, ndo, n_pi_pad, n_ps_pad, n_pad):
    """Resident-weight path: one fused matmul + activation per batch tile."""
    y = (jnp.dot(x_ref[...], w_ref[...], preferred_element_type=jnp.float32)
         + b_ref[...])
    _mdn_epilogue(y, o_ref, nd=nd, ndo=ndo, n_pi_pad=n_pi_pad, n_ps_pad=n_ps_pad, n_pad=n_pad)


def _mdn_kernel_ktiled(x_ref, w_ref, b_ref, o_ref, acc_ref, *,
                       nd, ndo, n_pi_pad, n_ps_pad, n_pad):
    """K-tiled path: f32 VMEM accumulator over the in_dim grid axis (for large in_dim / v7x)."""
    k = pl.program_id(1)

    @pl.when(k == 0)
    def _():
        acc_ref[...] = jnp.zeros_like(acc_ref)

    acc_ref[...] += jnp.dot(x_ref[...], w_ref[...], preferred_element_type=jnp.float32)

    @pl.when(k == pl.num_programs(1) - 1)
    def _():
        y = acc_ref[...] + b_ref[...]
        _mdn_epilogue(y, o_ref, nd=nd, ndo=ndo, n_pi_pad=n_pi_pad, n_ps_pad=n_ps_pad,
                      n_pad=n_pad)


def mdn_g_forward(x, params, n_dist, out_dim, *, tb=None, tk=None, use_bf16=False):
    """Pallas forward pass. x: (B, in_dim) float32.

    Returns (pi, sigma, mu) matching the PyTorch module:
      pi:    (B, n_dist)             softmax over dim=1
      sigma: (B, n_dist, out_dim)    exp of linear
      mu:    (B, n_dist, out_dim)    linear

    use_bf16=True casts x / W_cat to bf16 for the MXU (f32 accumulate + f32 epilogue);
    relaxes the ~1e-5 agreement to ~1e-2 relative.
    """
    B, in_dim = x.shape
    w_pi, b_pi, w_sig, b_sig, w_mu, b_mu = params
    nd = n_dist
    ndo = n_dist * out_dim
    n_total = nd + 2 * ndo
    n_pad = _round_up(n_total, 128)
    n_ps_pad = min(_round_up(nd + ndo, 128), n_pad)   # lanes that need the exp
    n_pi_pad = min(_round_up(nd, 128), n_ps_pad)      # lanes the softmax reduction scans

    op_dtype = jnp.bfloat16 if use_bf16 else jnp.float32
    opsz = 2 if use_bf16 else 4

    # Fuse the three heads into one lane-dense weight/bias slab.
    w_cat = jnp.concatenate([w_pi, w_sig, w_mu], axis=1)
    b_cat = jnp.concatenate([b_pi, b_sig, b_mu], axis=1)
    w_cat = jnp.pad(w_cat, ((0, 0), (0, n_pad - n_total)))
    b_cat = jnp.pad(b_cat, ((0, 0), (0, n_pad - n_total))).astype(jnp.float32)

    vmem_cap = _vmem_capacity_bytes()

    # K-tile when the (double-buffered) resident fused weight would eat too much VMEM.
    w_bytes = in_dim * n_pad * opsz
    use_ktile = (tk is not None) or (2 * w_bytes > (vmem_cap * 3) // 8)
    if use_ktile:
        if tk is None:
            # Keep the double-buffered weight K-slice around ~8 MiB; tk multiple of 128 lanes
            # (tk is the lane dim of the x block).
            tk = max(128, ((8 * 1024 * 1024) // (2 * n_pad * opsz)) // 128 * 128)
        else:
            tk = max(128, _round_up(tk, 128))
        tk = min(tk, _round_up(in_dim, 128))
        in_dim_p = _round_up(in_dim, tk)
        k_blocks = in_dim_p // tk
    else:
        tk = in_dim
        in_dim_p = in_dim
        k_blocks = 1

    if in_dim_p != in_dim:
        w_cat = jnp.pad(w_cat, ((0, in_dim_p - in_dim), (0, 0)))
    w_cat = w_cat.astype(op_dtype)

    x_in = x.astype(op_dtype)
    if in_dim_p != in_dim:
        x_in = jnp.pad(x_in, ((0, 0), (0, in_dim_p - in_dim)))

    # Batch tile: stream a few MiB per grid step so the ~0.35 us/step pipeline overhead is
    # amortized (previously capped at 512 rows -> step-overhead-bound for small feature dims).
    if tb is None:
        row_bytes = opsz * tk + 4 * n_pad
        tb = _round_up(max(8, (4 * 1024 * 1024) // row_bytes), 8)
        tb = min(tb, _round_up(B, 8))
        # v7x megacore: if the whole batch fits one step but is sizeable, split in two so the
        # "parallel" batch axis can shard across both TensorCores.
        if tb >= _round_up(B, 8) and B >= 2048:
            tb = _round_up(_cdiv(B, 2), 8)
    else:
        tb = max(8, _round_up(tb, 8))
    b_pad = _round_up(B, tb)
    n_blocks = b_pad // tb
    if b_pad != B:
        x_in = jnp.pad(x_in, ((0, b_pad - B), (0, 0)))

    # VMEM budget: double-buffered x/out tiles + weight slice (2 buffers) + bias + accumulator.
    vmem_need = (2 * tb * tk * opsz
                 + 2 * tb * n_pad * 4
                 + 2 * tk * n_pad * opsz
                 + 2 * n_pad * 4
                 + (tb * n_pad * 4 if use_ktile else 0))
    vmem_limit = min(max(2 * vmem_need, 32 * 1024 * 1024), (vmem_cap * 9) // 10)
    vmem_limit = max(vmem_limit, vmem_need + (1 << 20))   # never clamp below the real need
    vmem_limit = int(min(vmem_limit, vmem_cap))

    cost = pl.CostEstimate(
        flops=2 * b_pad * in_dim_p * n_pad,
        transcendentals=b_pad * (n_ps_pad + 1),           # merged exp slab + reciprocal
        bytes_accessed=(opsz * (b_pad * in_dim_p + in_dim_p * n_pad)
                        + 4 * (n_pad + b_pad * n_pad)),
    )

    kern_kwargs = dict(nd=nd, ndo=ndo, n_pi_pad=n_pi_pad, n_ps_pad=n_ps_pad, n_pad=n_pad)
    if use_ktile:
        kernel = partial(_mdn_kernel_ktiled, **kern_kwargs)
        grid = (n_blocks, k_blocks)
        in_specs = [
            pl.BlockSpec((tb, tk), lambda b, k: (b, k)),        # x tile, pipelined over batch & K
            pl.BlockSpec((tk, n_pad), lambda b, k: (k, 0)),     # weight K-slice, pipelined over K
            pl.BlockSpec((1, n_pad), lambda b, k: (0, 0)),      # bias, resident
        ]
        out_specs = pl.BlockSpec((tb, n_pad), lambda b, k: (b, 0))
        scratch_shapes = [pltpu.VMEM((tb, n_pad), jnp.float32)]
        dims = ("parallel", "arbitrary")
    else:
        kernel = partial(_mdn_kernel, **kern_kwargs)
        grid = (n_blocks,)
        in_specs = [
            pl.BlockSpec((tb, in_dim_p), lambda b: (b, 0)),     # x tile, pipelined over batch
            pl.BlockSpec((in_dim_p, n_pad), lambda b: (0, 0)),  # fused weights, VMEM-resident
            pl.BlockSpec((1, n_pad), lambda b: (0, 0)),         # fused bias, VMEM-resident
        ]
        out_specs = pl.BlockSpec((tb, n_pad), lambda b: (b, 0))
        scratch_shapes = []
        dims = ("parallel",)

    slab = pl.pallas_call(
        kernel,
        out_shape=jax.ShapeDtypeStruct((b_pad, n_pad), jnp.float32),
        grid=grid,
        in_specs=in_specs,
        out_specs=out_specs,
        scratch_shapes=scratch_shapes,
        compiler_params=pltpu.CompilerParams(
            dimension_semantics=dims,
            vmem_limit_bytes=vmem_limit,
        ),
        cost_estimate=cost,
    )(x_in, w_cat, b_cat)

    pi = slab[:B, :nd]
    sigma = slab[:B, nd:nd + ndo].reshape(-1, n_dist, out_dim)
    mu = slab[:B, nd + ndo:nd + 2 * ndo].reshape(-1, n_dist, out_dim)
    return pi, sigma, mu


def init_params(key, in_dim, out_dim, n_dist):
    """Deterministic init mirroring nn.Linear's U(-1/sqrt(in_dim), 1/sqrt(in_dim)).

    Weights stored as (in_dim, out_features) — the transpose of PyTorch's layout — so the
    kernel does x @ W directly.
    """
    bound = 1.0 / math.sqrt(in_dim)
    k = jax.random.split(key, 6)
    w_pi = jax.random.uniform(k[0], (in_dim, n_dist), jnp.float32, -bound, bound)
    b_pi = jax.random.uniform(k[1], (1, n_dist), jnp.float32, -bound, bound)
    w_sig = jax.random.uniform(k[2], (in_dim, out_dim * n_dist), jnp.float32, -bound, bound)
    b_sig = jax.random.uniform(k[3], (1, out_dim * n_dist), jnp.float32, -bound, bound)
    w_mu = jax.random.uniform(k[4], (in_dim, out_dim * n_dist), jnp.float32, -bound, bound)
    b_mu = jax.random.uniform(k[5], (1, out_dim * n_dist), jnp.float32, -bound, bound)
    return (w_pi, b_pi, w_sig, b_sig, w_mu, b_mu)


def mdn_g_reference(x, params, n_dist, out_dim):
    """Pure-JAX reference matching the PyTorch forward (f32-accurate matmuls)."""
    w_pi, b_pi, w_sig, b_sig, w_mu, b_mu = params
    hi = jax.lax.Precision.HIGHEST
    pi = jax.nn.softmax(jnp.dot(x, w_pi, precision=hi) + b_pi, axis=1)
    sigma = jnp.exp(jnp.dot(x, w_sig, precision=hi) + b_sig).reshape(-1, n_dist, out_dim)
    mu = (jnp.dot(x, w_mu, precision=hi) + b_mu).reshape(-1, n_dist, out_dim)
    return pi, sigma, mu


if __name__ == "__main__":
    key = jax.random.PRNGKey(0)
    kx, kp, kx2, kp2 = jax.random.split(key, 4)

    # --- Default path (f32, resident fused weights), small shapes consistent with the module ---
    B, in_dim, out_dim, n_dist = 8, 32, 4, 8
    x = jax.random.normal(kx, (B, in_dim), dtype=jnp.float32)
    params = init_params(kp, in_dim, out_dim, n_dist)

    pi, sigma, mu = mdn_g_forward(x, params, n_dist, out_dim)
    jax.block_until_ready((pi, sigma, mu))
    pi_r, sigma_r, mu_r = mdn_g_reference(x, params, n_dist, out_dim)

    assert pi.shape == (B, n_dist)
    assert sigma.shape == (B, n_dist, out_dim)
    assert mu.shape == (B, n_dist, out_dim)
    assert jnp.allclose(pi, pi_r, atol=1e-5, rtol=1e-5)
    assert jnp.allclose(sigma, sigma_r, atol=1e-5, rtol=1e-5)
    assert jnp.allclose(mu, mu_r, atol=1e-5, rtol=1e-5)
    assert jnp.allclose(jnp.sum(pi, axis=1), 1.0, atol=1e-5)

    # --- K-tiled accumulator path (forced tk=128 so in_dim spans two K blocks) ---
    B2, in2, od2, nd2 = 16, 160, 4, 8
    x2 = jax.random.normal(kx2, (B2, in2), dtype=jnp.float32)
    p2 = init_params(kp2, in2, od2, nd2)
    out_k = mdn_g_forward(x2, p2, nd2, od2, tk=128)
    jax.block_until_ready(out_k)
    ref_k = mdn_g_reference(x2, p2, nd2, od2)
    for got, ref in zip(out_k, ref_k):
        assert got.shape == ref.shape
        assert jnp.allclose(got, ref, atol=1e-5, rtol=1e-5)

    # --- Optional bf16-operand matmul path (f32 accumulate/epilogue; relaxed agreement) ---
    out_bf = mdn_g_forward(x, params, n_dist, out_dim, use_bf16=True)
    jax.block_until_ready(out_bf)
    for got, ref in zip(out_bf, (pi_r, sigma_r, mu_r)):
        assert got.shape == ref.shape
        assert jnp.allclose(got, ref, atol=5e-2, rtol=5e-2)

    print("KERNEL_OK")
</pallas_src>

<mosaic_0001>
module attributes {stable_mosaic.version = 11 : i64} {
  func.func @_mdn_kernel(%arg0: i32, %arg1: memref<8x32xf32, #tpu.memory_space<vmem>>, %arg2: memref<32x128xf32, #tpu.memory_space<vmem>>, %arg3: memref<1x128xf32, #tpu.memory_space<vmem>>, %arg4: memref<8x128xf32, #tpu.memory_space<vmem>>) attributes {dimension_semantics = [#tpu.dimension_semantics<parallel>], iteration_bounds = array<i64: 1>, scalar_prefetch = 0 : i64, scratch_operands = 0 : i64, tpu.core_type = #tpu.core_type<tc>, window_params = [{transform_indices = @transform_0, window_bounds = array<i64: 8, 32>}, {pipeline_mode = #tpu.pipeline_mode<synchronous>, transform_indices = @transform_1, window_bounds = array<i64: 32, 128>}, {pipeline_mode = #tpu.pipeline_mode<synchronous>, transform_indices = @transform_2, window_bounds = array<i64: 1, 128>}, {transform_indices = @transform_3, window_bounds = array<i64: 8, 128>}]} {
    %c0 = arith.constant 0 : index
    %c0_0 = arith.constant 0 : index
    %0 = vector.load %arg1[%c0, %c0_0] : memref<8x32xf32, #tpu.memory_space<vmem>>, vector<8x32xf32>
    %c0_1 = arith.constant 0 : index
    %c0_2 = arith.constant 0 : index
    %1 = vector.load %arg2[%c0_1, %c0_2] : memref<32x128xf32, #tpu.memory_space<vmem>>, vector<32x128xf32>
    %cst = arith.constant dense<0.000000e+00> : vector<8x128xf32>
    %2 = tpu.matmul %0, %1, %cst {dimension_numbers = #tpu.dot_dimension_numbers<[1], [0], [0], [1], [0, 0, 1, 1], [], []>} : vector<8x32xf32>, vector<32x128xf32>, vector<8x128xf32> -> vector<8x128xf32>
    %c0_3 = arith.constant 0 : index
    %c0_4 = arith.constant 0 : index
    %3 = vector.load %arg3[%c0_3, %c0_4] : memref<1x128xf32, #tpu.memory_space<vmem>>, vector<1x128xf32>
    %4 = vector.broadcast %3 : vector<1x128xf32> to vector<8x128xf32>
    %5 = arith.addf %2, %4 : vector<8x128xf32>
    %6 = tpu.iota {dimensions = array<i32: 1>} : vector<8x128xi32>
    %c8_i32 = arith.constant 8 : i32
    %7 = vector.broadcast %c8_i32 : i32 to vector<8x128xi32>
    %8 = arith.cmpi slt, %6, %7 : vector<8x128xi32>
    %cst_5 = arith.constant -3.40282347E+38 : f32
    %9 = vector.broadcast %cst_5 : f32 to vector<8x128xf32>
    %10 = arith.select %8, %5, %9 : vector<8x128xi1>, vector<8x128xf32>
    %cst_6 = arith.constant dense<0xFF800000> : vector<8xf32>
    %11 = vector.multi_reduction <maximumf>, %10, %cst_6 [1] : vector<8x128xf32> to vector<8xf32>
    %12 = vector.shape_cast %11 : vector<8xf32> to vector<8x1xf32>
    %13 = tpu.iota {dimensions = array<i32: 1>} : vector<8x128xi32>
    %c8_i32_7 = arith.constant 8 : i32
    %14 = vector.broadcast %c8_i32_7 : i32 to vector<8x128xi32>
    %15 = arith.cmpi slt, %13, %14 : vector<8x128xi32>
    %c8_i32_8 = arith.constant 8 : i32
    %16 = vector.broadcast %c8_i32_8 : i32 to vector<8x128xi32>
    %17 = arith.cmpi sge, %13, %16 : vector<8x128xi32>
    %c40_i32 = arith.constant 40 : i32
    %18 = vector.broadcast %c40_i32 : i32 to vector<8x128xi32>
    %19 = arith.cmpi slt, %13, %18 : vector<8x128xi32>
    %20 = arith.andi %17, %19 : vector<8x128xi1>
    %21 = vector.broadcast %12 : vector<8x1xf32> to vector<8x128xf32>
    %22 = arith.subf %5, %21 : vector<8x128xf32>
    %23 = arith.select %15, %22, %5 : vector<8x128xi1>, vector<8x128xf32>
    %24 = math.exp %23 : vector<8x128xf32>
    %cst_9 = arith.constant 0.000000e+00 : f32
    %25 = vector.broadcast %cst_9 : f32 to vector<8x128xf32>
    %26 = arith.select %8, %24, %25 : vector<8x128xi1>, vector<8x128xf32>
    %cst_10 = arith.constant dense<0.000000e+00> : vector<8xf32>
    %27 = vector.multi_reduction <add>, %26, %cst_10 [1] : vector<8x128xf32> to vector<8xf32>
    %28 = vector.shape_cast %27 : vector<8xf32> to vector<8x1xf32>
    %29 = tpu.reciprocal %28 {approx = true} : vector<8x1xf32> -> vector<8x1xf32>
    %30 = arith.mulf %28, %29 : vector<8x1xf32>
    %cst_11 = arith.constant 2.000000e+00 : f32
    %31 = vector.broadcast %cst_11 : f32 to vector<8x1xf32>
    %32 = arith.subf %31, %30 : vector<8x1xf32>
    %33 = arith.mulf %29, %32 : vector<8x1xf32>
    %34 = vector.broadcast %33 : vector<8x1xf32> to vector<8x128xf32>
    %35 = arith.mulf %24, %34 : vector<8x128xf32>
    %36 = arith.select %20, %24, %5 : vector<8x128xi1>, vector<8x128xf32>
    %37 = arith.select %15, %35, %36 : vector<8x128xi1>, vector<8x128xf32>
    %c0_12 = arith.constant 0 : index
    %c0_13 = arith.constant 0 : index
    %38 = vector.load %arg4[%c0_12, %c0_13] : memref<8x128xf32, #tpu.memory_space<vmem>>, vector<8x128xf32>
    tpu.vector_store %arg4[%c0_12, %c0_13], %37 {strides = array<i32>} : memref<8x128xf32, #tpu.memory_space<vmem>>, vector<8x128xf32>,
    return
  }
  func.func @transform_0(%arg0: i32) -> (i32, i32) {
    %c0_i32 = arith.constant 0 : i32
    %c0_i32_0 = arith.constant 0 : i32
    return %arg0, %c0_i32 : i32, i32
  }
  func.func @transform_1(%arg0: i32) -> (i32, i32) {
    %c0_i32 = arith.constant 0 : i32
    %c0_i32_0 = arith.constant 0 : i32
    %c0_i32_1 = arith.constant 0 : i32
    return %c0_i32, %c0_i32_0 : i32, i32
  }
  func.func @transform_2(%arg0: i32) -> (i32, i32) {
    %c0_i32 = arith.constant 0 : i32
    %c0_i32_0 = arith.constant 0 : i32
    %c0_i32_1 = arith.constant 0 : i32
    return %c0_i32, %c0_i32_0 : i32, i32
  }
  func.func @transform_3(%arg0: i32) -> (i32, i32) {
    %c0_i32 = arith.constant 0 : i32
    %c0_i32_0 = arith.constant 0 : i32
    return %arg0, %c0_i32 : i32, i32
  }
}

</mosaic_0001>

<llo_original>
// kernel: tpu_custom_call.1
$region0: #{tpu_custom_call.1}
  #allocation0 [shape = 'u32[]', space=smem, size = 0x4, offset = 0x4, fixed_abs, tag = 'smem constant byte address 0x4 - core index']
  #allocation1 [shape = 'u32[144,128]{1,0:T(1,128)}', space=vmem, size = 0x12000, scoped, tag = 'internal scratch']
  %s0 = inlined_call_operand.hbm [shape: f32[8,32], index: 0, kind: input, shape index: {}]
  %s1 = inlined_call_operand.hbm [shape: f32[32,128], index: 1, kind: input, shape index: {}]
  %s2 = inlined_call_operand.vmem [shape: f32[1,128], index: 2, kind: input, shape index: {}]
  %s3 = inlined_call_operand.hbm [shape: f32[8,128], index: 3, kind: output, shape index: {}]
  %s4 = sld [smem:[#allocation0]]
  $region30: #{tpu_custom_call.1} parent=0
    _
  %s6 = ssub.s32 1, %s4
  %s7 = scalar_select 0, %s6, %s4
  $region1: #{tpu_custom_call.1} parent=0
    #allocation2 [shape = 'u8[4096]{0}', space=vmem, size = 0x1000, scoped, tag = 'input window, operand 0, single buffered']
    #allocation3 [shape = 's32[1]{0}', space=sflag, size = 0x4, scoped, tag = 'scoped memory for tpu_custom_call.1']
    #allocation4 [shape = 's32[1]{0}', space=sflag, size = 0x4, scoped, tag = 'scoped memory for tpu_custom_call.1']
    #allocation5 [shape = 'u8[16384]{0}', space=vmem, size = 0x4000, scoped, tag = 'input window, operand 1, single buffered']
    #allocation6 [shape = 's32[1]{0}', space=sflag, size = 0x4, scoped, tag = 'scoped memory for tpu_custom_call.1']
    #allocation7 [shape = 'u8[4096]{0}', space=vmem, size = 0x1000, scoped, tag = 'output window, operand 0, single buffered']
    %8 = vsyncpa [#allocation3], 0
    %9 = vsyncpa [#allocation6], 0
    %10 = vsyncpa [#allocation4], 0
    // Predicated region
    $region2: #{tpu_custom_call.1} parent=1 // pred_check
      _
    $region3: #{tpu_custom_call.1} parent=1 // pred_check_branch
      %12 = sbr.rel (0) target = $region5
    $region4: #{tpu_custom_call.1} parent=1 // pred_region
      %s14 = ssub.s32 128, 128
      %15 = vsyncadd [#allocation3], %s14
      %s17 = sshll.u32 [#allocation2], 4
      %s18 = int_to_ptr.vmem [resolvable:$true] %s17
      %20 = dma.hbm_to_vmem [thread:$0]  %s0, 128, %s18, [#allocation3]
    $region5: #{tpu_custom_call.1} parent=1 // pred_fallthru
      _
    // Predicated region
    $region6: #{tpu_custom_call.1} parent=1 // pred_check
      _
    $region7: #{tpu_custom_call.1} parent=1 // pred_check_branch
      %22 = sbr.rel (0) target = $region9
    $region8: #{tpu_custom_call.1} parent=1 // pred_region
      %s24 = ssub.s32 512, 512
      %25 = vsyncadd [#allocation6], %s24
      %s26 = sshll.u32 [#allocation5], 4
      %s27 = int_to_ptr.vmem [resolvable:$true] %s26
      %32 = dma.hbm_to_vmem [thread:$0]  %s1, 512, %s27, [#allocation6], 128, 128, 8
    $region9: #{tpu_custom_call.1} parent=1 // pred_fallthru
      _
    // Predicated region
    $region10: #{tpu_custom_call.1} parent=1 // pred_check
      _
    $region11: #{tpu_custom_call.1} parent=1 // pred_check_branch
      %34 = sbr.rel (0) target = $region13
    $region12: #{tpu_custom_call.1} parent=1 // pred_region
      _
    $region13: #{tpu_custom_call.1} parent=1 // pred_fallthru
      _
    // Predicated region
    $region14: #{tpu_custom_call.1} parent=1 // pred_check
      _
    $region15: #{tpu_custom_call.1} parent=1 // pred_check_branch
      %36 = sbr.rel (0) target = $region17
    $region16: #{tpu_custom_call.1} parent=1 // pred_region
      %37 = dma.done [#allocation3], 128
    $region17: #{tpu_custom_call.1} parent=1 // pred_fallthru
      _
    // Predicated region
    $region18: #{tpu_custom_call.1} parent=1 // pred_check
      _
    $region19: #{tpu_custom_call.1} parent=1 // pred_check_branch
      %39 = sbr.rel (0) target = $region21
    $region20: #{tpu_custom_call.1} parent=1 // pred_region
      %40 = dma.done [#allocation6], 512
    $region21: #{tpu_custom_call.1} parent=1 // pred_fallthru
      _
    %v41 = vld [vmem:[#allocation2] sm:$0xff]
    %v42 = vld [vmem:[#allocation5] sm:$0xff]
    %v43 = vld [vmem:[#allocation5 + $0x8] sm:$0xff]
    %v44 = vld [vmem:[#allocation5 + $0x10] sm:$0xff]
    %v45 = vld [vmem:[#allocation5 + $0x18] sm:$0xff]
    %v46 = vld [vmem:[%s2] sm:$0x1]
    %v48 = vlaneseq
    %v49 = vshrl.u32 %v48, 7
    %v50 = vsub.s32 0, %v49
    %v51 = vrot.slane %v46, %v50
    %vm53 = vcmask 261120
    %v55 = vsel %vm53, %v41, 0
    %57 = vmatprep.subr.mxu0 0.0
    %58 = vmatpush1.msra.mxu0 %v42
    %59 = vmatprep.subr.mxu0 0.0
    %60 = vmatpush1.msra.mxu0 %v43
    %61 = vmatprep.subr.mxu0 0.0
    %62 = vmatpush1.msra.mxu0 %v44
    %63 = vmatprep.subr.mxu0 0.0
    %64 = vmatpush1.msra.mxu0 %v45
    %65 = vmatprep.subr.mxu0 0.0
    %66 = vmatpush1.msra.mxu0 0.0
    %67 = vmatprep.subr.mxu0 0.0
    %68 = vmatpush1.msra.mxu0 0.0
    %69 = vmatprep.subr.mxu0 0.0
    %70 = vmatpush1.msra.mxu0 0.0
    %71 = vmatprep.subr.mxu0 0.0
    %72 = vmatpush1.msra.mxu0 0.0
    %73 = vmatprep.subr.mxu0 0.0
    %74 = vmatpush1.msra.mxu0 0.0
    %75 = vmatprep.subr.mxu0 0.0
    %76 = vmatpush1.msra.mxu0 0.0
    %77 = vmatprep.subr.mxu0 0.0
    %78 = vmatpush1.msra.mxu0 0.0
    %79 = vmatprep.subr.mxu0 0.0
    %80 = vmatpush1.msra.mxu0 0.0
    %81 = vmatprep.subr.mxu0 0.0
    %82 = vmatpush1.msra.mxu0 0.0
    %83 = vmatprep.subr.mxu0 0.0
    %84 = vmatpush1.msra.mxu0 0.0
    %85 = vmatprep.subr.mxu0 0.0
    %86 = vmatpush1.msra.mxu0 0.0
    %87 = vmatprep.subr.mxu0 0.0
    %88 = vmatpush1.msra.mxu0 0.0
    %89 = vmatprep.subr.mxu0 0.0
    %90 = vmatpush1.msra.mxu0 0.0
    %91 = vmatprep.subr.mxu0 0.0
    %92 = vmatpush1.msra.mxu0 0.0
    %93 = vmatprep.subr.mxu0 0.0
    %94 = vmatpush1.msra.mxu0 0.0
    %95 = vmatprep.subr.mxu0 0.0
    %96 = vmatpush1.msra.mxu0 0.0
    %97 = vmatprep.subr.mxu0 0.0
    %98 = vmatpush1.msra.mxu0 0.0
    %99 = vmatprep.subr.mxu0 0.0
    %100 = vmatpush1.msra.mxu0 0.0
    %101 = vmatprep.subr.mxu0 0.0
    %102 = vmatpush1.msra.mxu0 0.0
    %103 = vmatprep.subr.mxu0 0.0
    %104 = vmatpush1.msra.mxu0 0.0
    %105 = vmatprep.subr.mxu0 0.0
    %106 = vmatpush1.msra.mxu0 0.0
    %107 = vmatprep.subr.mxu0 0.0
    %108 = vmatpush1.msra.mxu0 0.0
    %109 = vmatprep.subr.mxu0 0.0
    %110 = vmatpush1.msra.mxu0 0.0
    %111 = vmatprep.subr.mxu0 0.0
    %112 = vmatpush1.msra.mxu0 0.0
    %113 = vmatprep.subr.mxu0 0.0
    %114 = vmatpush1.msra.mxu0 0.0
    %115 = vmatprep.subr.mxu0 0.0
    %116 = vmatpush1.msra.mxu0 0.0
    %117 = vmatprep.subr.mxu0 0.0
    %118 = vmatpush1.msra.mxu0 0.0
    %119 = vmatprep.subr.mxu0 0.0
    %120 = vmatpush1.msra.mxu0 0.0
    %121 = vmatprep.mubr.f32.mxu0 0.0
    %122 = vmatmul.mubr.f32.gmra.mrb[0].mxu0 %v55
    %v123 = vpop.f32.mrb[0].mxu0
    %v124 = vadd.f32 %v51, %v123
    %v125 = vpop.f32.mrb[0].mxu0
    %126 = vdwg.mxu0
    %v127 = vlaneseq
    %v128 = vand.u32 %v127, 127
    %vm129 = vcmp.lt.s32.totalorder %v128, 8
    %v130 = vsel %vm129, %v124, -3.4028235e+38
    %131 = vmax.xlane.f32.xlu0 %v130
    %v132 = vpop.xlane.xlu0 %131
    %vm133 = vcmp.ge.s32.totalorder %v128, 8
    %vm134 = vcmp.lt.s32.totalorder %v128, 40
    %vm135 = vmand %vm133, %vm134
    %v136 = vsub.f32 %v124, %v132
    %v137 = vsel %vm129, %v136, %v124
    %v138 = vmul.f32 %v137, 1.442695
    %v139 = vpow.pop %v138
    %v140 = vsel %vm129, %v139, 0.0
    %141 = vadd.xlane.f32.xlu0 %v140
    %v142 = vpop.xlane.xlu0 %141
    %v143 = vrcp.pop %v142
    %v144 = vmul.f32 %v142, %v143
    %v145 = vsub.f32 2.0, %v144
    %v146 = vmul.f32 %v143, %v145
    %v147 = vmul.f32 %v139, %v146
    %v148 = vsel %vm135, %v139, %v124
    %v149 = vsel %vm129, %v147, %v148
    %150 = vst [vmem:[#allocation7] sm:$0xff] %v149
    // Predicated region
    $region22: #{tpu_custom_call.1} parent=1 // pred_check
      _
    $region23: #{tpu_custom_call.1} parent=1 // pred_check_branch
      %152 = sbr.rel (0) target = $region25
    $region24: #{tpu_custom_call.1} parent=1 // pred_region
      %s154 = ssub.s32 128, 128
      %155 = vsyncadd [#allocation4], %s154
      %s157 = sshll.u32 [#allocation7], 4
      %s158 = int_to_ptr.vmem [resolvable:$true] %s157
      %160 = dma.vmem_to_hbm [thread:$0]  %s158, 128, %s3, [#allocation4]
    $region25: #{tpu_custom_call.1} parent=1 // pred_fallthru
      _
    // Predicated region
    $region26: #{tpu_custom_call.1} parent=1 // pred_check
      _
    $region27: #{tpu_custom_call.1} parent=1 // pred_check_branch
      %162 = sbr.rel (0) target = $region29
    $region28: #{tpu_custom_call.1} parent=1 // pred_region
      %163 = dma.done [#allocation4], 128
    $region29: #{tpu_custom_call.1} parent=1 // pred_fallthru
      _
    %164 = vsyncpa [#allocation3], 1
    %165 = vsyncpa [#allocation6], 1
    %166 = vsyncpa [#allocation4], 1

</llo_original>
